<compile_context>
chip_gen: v7x
topology: tpu7x:2x2x1
jax: 0.10.0
libtpu: 0.0.40
codegen_flags: <defaults>
</compile_context>

<pallas_src>
import math

import jax
import jax.numpy as jnp
from jax.experimental import pallas as pl
from jax.experimental.pallas import tpu as pltpu

NEAR_INF = 1e20  # matches neginf() for non-fp16 dtypes in the PyTorch module

_VMEM_LIMIT_CACHE = None


def _vmem_limit():
    """Per-call VMEM budget: physical capacity minus 16 MiB compiler headroom."""
    global _VMEM_LIMIT_CACHE
    if _VMEM_LIMIT_CACHE is None:
        try:
            cap = int(pltpu.get_tpu_info().vmem_capacity_bytes)
        except Exception:
            cap = 64 * 1024 * 1024  # conservative default (v7x per-TC VMEM)
        _VMEM_LIMIT_CACHE = max(cap - 16 * 1024 * 1024, 32 * 1024 * 1024)
    return _VMEM_LIMIT_CACHE


def _pick_tile(dim, pref, align):
    """Largest tile <= pref that divides `dim` and is a multiple of `align`,
    falling back to the full dim (always a legal BlockSpec block size)."""
    if dim <= pref:
        return dim
    t = (pref // align) * align
    while t >= align:
        if dim % t == 0:
            return t
        t -= align
    return dim


# ----------------------------------------------------------------------------
# Tiled linear: out = x @ w + b   (bf16 operands, f32 accumulation)
# ----------------------------------------------------------------------------
def _linear_fullk_kernel(x_ref, w_ref, b_ref, o_ref):
    # Full contraction depth in one MXU pass; no accumulator round-trips.
    o_ref[...] = (
        jnp.dot(x_ref[...], w_ref[...], preferred_element_type=jnp.float32)
        + b_ref[...]
    ).astype(o_ref.dtype)


def _linear_ktiled_kernel(x_ref, w_ref, b_ref, o_ref, acc_ref):
    @pl.when(pl.program_id(2) == 0)
    def _init():
        acc_ref[...] = jnp.zeros_like(acc_ref)

    acc_ref[...] += jnp.dot(x_ref[...], w_ref[...],
                            preferred_element_type=jnp.float32)

    @pl.when(pl.program_id(2) == pl.num_programs(2) - 1)
    def _finalize():
        # bias is only added once, on the final K step
        o_ref[...] = (acc_ref[...] + b_ref[...]).astype(o_ref.dtype)


def pallas_linear(x, w, b, out_dtype, tm=512, tn=512, tk=1024, full_k_max=4096):
    """x: (M, K) bf16, w: (K, N) bf16, b: (1, N) f32 -> (M, N) out_dtype."""
    m, kin = x.shape
    n = w.shape[1]
    tm = _pick_tile(m, tm, 128)
    tn = _pick_tile(n, tn, 128)

    if kin <= full_k_max:
        # Full-K blocks: no reduction grid axis, no acc scratch, weights fetched
        # once per (i, j) tile.  ~20 MiB worst case at tm=tn=512, K=4096 bf16.
        grid = (m // tm, n // tn)
        return pl.pallas_call(
            _linear_fullk_kernel,
            out_shape=jax.ShapeDtypeStruct((m, n), out_dtype),
            grid_spec=pltpu.PrefetchScalarGridSpec(
                num_scalar_prefetch=0,
                grid=grid,
                in_specs=[
                    pl.BlockSpec((tm, kin), lambda i, j: (i, 0)),
                    pl.BlockSpec((kin, tn), lambda i, j: (0, j)),
                    pl.BlockSpec((1, tn), lambda i, j: (0, j)),
                ],
                out_specs=pl.BlockSpec((tm, tn), lambda i, j: (i, j)),
            ),
            compiler_params=pltpu.CompilerParams(
                dimension_semantics=("parallel", "parallel"),
                vmem_limit_bytes=_vmem_limit(),
            ),
        )(x, w, b)

    # Large-K fallback: tile the reduction axis with an f32 VMEM accumulator.
    tk = _pick_tile(kin, tk, 128)
    grid = (m // tm, n // tn, kin // tk)
    return pl.pallas_call(
        _linear_ktiled_kernel,
        out_shape=jax.ShapeDtypeStruct((m, n), out_dtype),
        grid_spec=pltpu.PrefetchScalarGridSpec(
            num_scalar_prefetch=0,
            grid=grid,
            in_specs=[
                pl.BlockSpec((tm, tk), lambda i, j, k: (i, k)),
                pl.BlockSpec((tk, tn), lambda i, j, k: (k, j)),
                pl.BlockSpec((1, tn), lambda i, j, k: (0, j)),
            ],
            out_specs=pl.BlockSpec((tm, tn), lambda i, j, k: (i, j)),
            scratch_shapes=[pltpu.VMEM((tm, tn), jnp.float32)],
        ),
        compiler_params=pltpu.CompilerParams(
            dimension_semantics=("parallel", "parallel", "arbitrary"),
            vmem_limit_bytes=_vmem_limit(),
        ),
    )(x, w, b)


# ----------------------------------------------------------------------------
# Flash-style attention: grid = (batch, head, q-tile, kv-tile), online softmax.
# Operands are (B, H, L, d) so every block is lane-dense with d as the last dim.
# ----------------------------------------------------------------------------
def _flash_attn_kernel(q_ref, k_ref, v_ref, bias_ref, o_ref, m_sc, l_sc, acc_sc):
    ki = pl.program_id(3)

    @pl.when(ki == 0)
    def _init():
        m_sc[...] = jnp.full_like(m_sc, -jnp.inf)
        l_sc[...] = jnp.zeros_like(l_sc)
        acc_sc[...] = jnp.zeros_like(acc_sc)

    q = q_ref[0, 0]            # (tq, d) bf16   (1/sqrt(d) folded into W_q)
    k = k_ref[0, 0]            # (tk, d) bf16
    v = v_ref[0, 0]            # (tk, d) bf16
    bias = bias_ref[0]         # (1, tk) f32 additive mask bias (0 / -NEAR_INF)

    # QK^T without an explicit transpose: contract the d axis directly.
    s = jax.lax.dot_general(
        q, k, dimension_numbers=(((1,), (1,)), ((), ())),
        preferred_element_type=jnp.float32)          # (tq, tk) f32
    s = s + bias                                     # single VPU add per tile

    m_prev = m_sc[...]
    m_new = jnp.maximum(m_prev, jnp.max(s, axis=-1, keepdims=True))
    alpha = jnp.exp(m_prev - m_new)
    p = jnp.exp(s - m_new)
    l_sc[...] = alpha * l_sc[...] + jnp.sum(p, axis=-1, keepdims=True)
    acc_sc[...] = alpha * acc_sc[...] + jnp.dot(
        p.astype(v.dtype), v, preferred_element_type=jnp.float32)
    m_sc[...] = m_new

    @pl.when(ki == pl.num_programs(3) - 1)
    def _finalize():
        # attn_dropout(p=0) is the identity.
        o_ref[0, 0] = (acc_sc[...] * pl.reciprocal(l_sc[...], approx=True)
                       ).astype(o_ref.dtype)


def pallas_attention(q, k, v, bias3, tq_pref=256, tk_pref=512):
    """q: (B,H,Lq,d) bf16; k,v: (B,H,Lk,d) bf16; bias3: (B,1,Lk) f32 additive."""
    b, h, lq, d = q.shape
    lk = k.shape[2]
    tq = _pick_tile(lq, tq_pref, 8)
    tk = _pick_tile(lk, tk_pref, 128)
    grid = (b, h, lq // tq, lk // tk)
    return pl.pallas_call(
        _flash_attn_kernel,
        out_shape=jax.ShapeDtypeStruct((b, h, lq, d), jnp.bfloat16),
        grid_spec=pltpu.PrefetchScalarGridSpec(
            num_scalar_prefetch=0,
            grid=grid,
            in_specs=[
                pl.BlockSpec((1, 1, tq, d), lambda bi, hi, qi, ki: (bi, hi, qi, 0)),
                pl.BlockSpec((1, 1, tk, d), lambda bi, hi, qi, ki: (bi, hi, ki, 0)),
                pl.BlockSpec((1, 1, tk, d), lambda bi, hi, qi, ki: (bi, hi, ki, 0)),
                # One (1, tk) mask-bias row shared by every head (no H-fold repeat).
                pl.BlockSpec((1, 1, tk), lambda bi, hi, qi, ki: (bi, 0, ki)),
            ],
            out_specs=pl.BlockSpec((1, 1, tq, d),
                                   lambda bi, hi, qi, ki: (bi, hi, qi, 0)),
            scratch_shapes=[
                pltpu.VMEM((tq, 1), jnp.float32),   # running max
                pltpu.VMEM((tq, 1), jnp.float32),   # running denom
                pltpu.VMEM((tq, d), jnp.float32),   # output accumulator
            ],
        ),
        compiler_params=pltpu.CompilerParams(
            dimension_semantics=("parallel", "parallel", "parallel", "arbitrary"),
            vmem_limit_bytes=_vmem_limit(),
        ),
    )(q, k, v, bias3)


# ----------------------------------------------------------------------------
# Module wrapper (parameter setup + glue in plain JAX)
# ----------------------------------------------------------------------------
class MultiHeadAttentionPallas:
    def __init__(self, n_heads, qdim, kdim, vdim, hdim, key):
        assert hdim % n_heads == 0
        self.n_heads = n_heads
        self.dim = hdim

        def xavier_normal(k, in_dim, out_dim):
            std = math.sqrt(2.0 / (in_dim + out_dim))
            # stored as (in_dim, out_dim) so x @ w == x @ W_torch.T
            return std * jax.random.normal(k, (in_dim, out_dim), jnp.float32)

        def bias_init(k, in_dim, out_dim):
            bound = 1.0 / math.sqrt(in_dim)
            return jax.random.uniform(
                k, (1, out_dim), jnp.float32, minval=-bound, maxval=bound)

        ks = jax.random.split(key, 8)
        self.wq, self.bq = xavier_normal(ks[0], qdim, hdim), bias_init(ks[1], qdim, hdim)
        self.wk, self.bk = xavier_normal(ks[2], kdim, hdim), bias_init(ks[3], kdim, hdim)
        self.wv, self.bv = xavier_normal(ks[4], vdim, hdim), bias_init(ks[5], vdim, hdim)
        self.wo, self.bo = xavier_normal(ks[6], hdim, hdim), bias_init(ks[7], hdim, hdim)

    def __call__(self, query, key, value, mask):
        assert mask is not None, "Mask is None, please specify a mask"
        if key is None and value is None:
            key = value = query
        elif value is None:
            value = key

        b, lq, _ = query.shape
        _, lk, _ = key.shape
        hdim = self.dim
        h = self.n_heads
        d = hdim // h
        inv_scale = 1.0 / math.sqrt(d)

        # Fold q.div_(scale) into the q projection (weights AND bias).
        wq_s = self.wq * inv_scale
        bq_s = self.bq * inv_scale

        def as2d(x):
            n, s, f = x.shape
            return x.reshape(n * s, f).astype(jnp.bfloat16)

        if key is query and value is query:
            # Self-attention: one fused QKV projection (read activations once).
            w_qkv = jnp.concatenate([wq_s, self.wk, self.wv], axis=1).astype(jnp.bfloat16)
            b_qkv = jnp.concatenate([bq_s, self.bk, self.bv], axis=1)
            y = pallas_linear(as2d(query), w_qkv, b_qkv, jnp.bfloat16)
            q2 = y[:, :hdim]
            k2 = y[:, hdim:2 * hdim]
            v2 = y[:, 2 * hdim:]
        elif key is value:
            # Cross-attention with shared K/V input: fuse K and V projections.
            q2 = pallas_linear(as2d(query), wq_s.astype(jnp.bfloat16), bq_s, jnp.bfloat16)
            w_kv = jnp.concatenate([self.wk, self.wv], axis=1).astype(jnp.bfloat16)
            b_kv = jnp.concatenate([self.bk, self.bv], axis=1)
            ykv = pallas_linear(as2d(key), w_kv, b_kv, jnp.bfloat16)
            k2 = ykv[:, :hdim]
            v2 = ykv[:, hdim:]
        else:
            q2 = pallas_linear(as2d(query), wq_s.astype(jnp.bfloat16), bq_s, jnp.bfloat16)
            k2 = pallas_linear(as2d(key), self.wk.astype(jnp.bfloat16), self.bk, jnp.bfloat16)
            v2 = pallas_linear(as2d(value), self.wv.astype(jnp.bfloat16), self.bv, jnp.bfloat16)

        # Head split (B, L, H*d) -> (B, H, L, d): each kernel operand stays
        # lane-dense with d last; no non-128-aligned per-head lane slicing in-kernel.
        # TODO(synk): when d is a multiple of 128, switch to a (B, L, H, d) layout
        # with a squeezed head grid dim to drop this HBM transpose entirely.
        def split_heads(x2d, seq_len):
            return x2d.reshape(b, seq_len, h, d).transpose(0, 2, 1, 3)

        qh = split_heads(q2, lq)
        kh = split_heads(k2, lk)
        vh = split_heads(v2, lk)

        # Additive mask bias computed ONCE (masked_fill(-1e20) is numerically
        # identical to adding -1e20 in f32 for reasonable logits).
        bias3 = jnp.where(mask.reshape(b, 1, lk) == 0, -NEAR_INF, 0.0).astype(jnp.float32)

        oh = pallas_attention(qh, kh, vh, bias3)                   # (B, H, Lq, d) bf16
        attn_out = oh.transpose(0, 2, 1, 3).reshape(b * lq, hdim)  # (B*Lq, H*d)

        out = pallas_linear(attn_out, self.wo.astype(jnp.bfloat16), self.bo,
                            jnp.float32).reshape(b, lq, hdim)
        # torch .squeeze(1): only removes dim 1 if its size is 1
        if out.shape[1] == 1:
            out = out[:, 0, :]
        return out


# ----------------------------------------------------------------------------
# Pure-JAX reference mirroring the same bf16/f32 precision pipeline
# ----------------------------------------------------------------------------
def reference_forward(mha, query, key, value, mask):
    if key is None and value is None:
        key = value = query
    elif value is None:
        value = key
    b, lq, _ = query.shape
    _, lk, _ = key.shape
    h, dim = mha.n_heads, mha.dim
    d = dim // h
    inv_scale = 1.0 / math.sqrt(d)

    def lin(x2d, w, bb):
        return jnp.dot(x2d.astype(jnp.bfloat16), w.astype(jnp.bfloat16),
                       preferred_element_type=jnp.float32) + bb[0]

    q = lin(query.reshape(b * lq, -1), mha.wq * inv_scale, mha.bq * inv_scale)
    k = lin(key.reshape(b * lk, -1), mha.wk, mha.bk)
    v = lin(value.reshape(b * lk, -1), mha.wv, mha.bv)
    q = q.astype(jnp.bfloat16).reshape(b, lq, h, d)
    k = k.astype(jnp.bfloat16).reshape(b, lk, h, d)
    v = v.astype(jnp.bfloat16).reshape(b, lk, h, d)

    s = jnp.einsum("bqhd,bkhd->bhqk", q, k, preferred_element_type=jnp.float32)
    s = jnp.where(mask[:, None, None, :] == 0, -NEAR_INF, s)
    attn = jax.nn.softmax(s, axis=-1)
    o = jnp.einsum("bhqk,bkhd->bqhd", attn.astype(jnp.bfloat16), v,
                   preferred_element_type=jnp.float32)
    o = o.reshape(b, lq, dim).astype(jnp.bfloat16)

    out = lin(o.reshape(b * lq, dim), mha.wo, mha.bo).reshape(b, lq, dim)
    return out if out.shape[1] != 1 else out[:, 0, :]


if __name__ == "__main__":
    B, N_HEADS, LQ, LK = 2, 4, 8, 8
    QDIM = KDIM = VDIM = HDIM = 32

    root = jax.random.PRNGKey(0)
    k_params, k_q, k_k, k_v, k_m = jax.random.split(root, 5)

    mha = MultiHeadAttentionPallas(N_HEADS, QDIM, KDIM, VDIM, HDIM, k_params)

    query = jax.random.normal(k_q, (B, LQ, QDIM), jnp.float32)
    key = jax.random.normal(k_k, (B, LK, KDIM), jnp.float32)
    value = jax.random.normal(k_v, (B, LK, VDIM), jnp.float32)
    mask = jax.random.bernoulli(k_m, 0.7, (B, LK)).astype(jnp.float32)
    mask = mask.at[:, 0].set(1.0)  # ensure at least one unmasked key per row

    # Cross-attention path (separate projections).
    out = jax.block_until_ready(mha(query, key, value, mask))
    ref = reference_forward(mha, query, key, value, mask)
    assert out.shape == (B, LQ, HDIM), out.shape
    # bf16 matmuls + approx reciprocal in the kernel -> bf16-level tolerance
    assert jnp.allclose(out, ref, atol=5e-2, rtol=5e-2), float(
        jnp.max(jnp.abs(out - ref)))

    # Self-attention path (fused QKV projection).
    out_sa = jax.block_until_ready(mha(query, None, None, mask))
    ref_sa = reference_forward(mha, query, None, None, mask)
    assert out_sa.shape == (B, LQ, HDIM), out_sa.shape
    assert jnp.allclose(out_sa, ref_sa, atol=5e-2, rtol=5e-2), float(
        jnp.max(jnp.abs(out_sa - ref_sa)))

    print("KERNEL_OK")
</pallas_src>

<mosaic_0001>
module attributes {stable_mosaic.version = 11 : i64} {
  func.func @_linear_fullk_kernel(%arg0: i32, %arg1: i32, %arg2: memref<16x32xbf16, #tpu.memory_space<vmem>>, %arg3: memref<32x32xbf16, #tpu.memory_space<vmem>>, %arg4: memref<1x32xf32, #tpu.memory_space<vmem>>, %arg5: memref<16x32xbf16, #tpu.memory_space<vmem>>) attributes {dimension_semantics = [#tpu.dimension_semantics<parallel>, #tpu.dimension_semantics<parallel>], iteration_bounds = array<i64: 1, 1>, scalar_prefetch = 0 : i64, scratch_operands = 0 : i64, tpu.core_type = #tpu.core_type<tc>, window_params = [{transform_indices = @transform_0, window_bounds = array<i64: 16, 32>}, {transform_indices = @transform_1, window_bounds = array<i64: 32, 32>}, {transform_indices = @transform_2, window_bounds = array<i64: 1, 32>}, {transform_indices = @transform_3, window_bounds = array<i64: 16, 32>}]} {
    %c0 = arith.constant 0 : index
    %c0_0 = arith.constant 0 : index
    %0 = vector.load %arg2[%c0, %c0_0] : memref<16x32xbf16, #tpu.memory_space<vmem>>, vector<16x32xbf16>
    %c0_1 = arith.constant 0 : index
    %c0_2 = arith.constant 0 : index
    %1 = vector.load %arg3[%c0_1, %c0_2] : memref<32x32xbf16, #tpu.memory_space<vmem>>, vector<32x32xbf16>
    %cst = arith.constant dense<0.000000e+00> : vector<16x32xf32>
    %2 = tpu.matmul %0, %1, %cst {dimension_numbers = #tpu.dot_dimension_numbers<[1], [0], [0], [1], [0, 0, 1, 1], [], []>} : vector<16x32xbf16>, vector<32x32xbf16>, vector<16x32xf32> -> vector<16x32xf32>
    %c0_3 = arith.constant 0 : index
    %c0_4 = arith.constant 0 : index
    %3 = vector.load %arg4[%c0_3, %c0_4] : memref<1x32xf32, #tpu.memory_space<vmem>>, vector<1x32xf32>
    %4 = vector.broadcast %3 : vector<1x32xf32> to vector<16x32xf32>
    %5 = arith.addf %2, %4 : vector<16x32xf32>
    %6 = arith.truncf %5 : vector<16x32xf32> to vector<16x32xbf16>
    %c0_5 = arith.constant 0 : index
    %c0_6 = arith.constant 0 : index
    %7 = vector.load %arg5[%c0_5, %c0_6] : memref<16x32xbf16, #tpu.memory_space<vmem>>, vector<16x32xbf16>
    tpu.vector_store %arg5[%c0_5, %c0_6], %6 {strides = array<i32>} : memref<16x32xbf16, #tpu.memory_space<vmem>>, vector<16x32xbf16>,
    return
  }
  func.func @transform_0(%arg0: i32, %arg1: i32) -> (i32, i32) {
    %c0_i32 = arith.constant 0 : i32
    %c0_i32_0 = arith.constant 0 : i32
    return %arg0, %c0_i32 : i32, i32
  }
  func.func @transform_1(%arg0: i32, %arg1: i32) -> (i32, i32) {
    %c0_i32 = arith.constant 0 : i32
    %c0_i32_0 = arith.constant 0 : i32
    return %c0_i32, %arg1 : i32, i32
  }
  func.func @transform_2(%arg0: i32, %arg1: i32) -> (i32, i32) {
    %c0_i32 = arith.constant 0 : i32
    %c0_i32_0 = arith.constant 0 : i32
    return %c0_i32, %arg1 : i32, i32
  }
  func.func @transform_3(%arg0: i32, %arg1: i32) -> (i32, i32) {
    %c0_i32 = arith.constant 0 : i32
    return %arg0, %arg1 : i32, i32
  }
}

</mosaic_0001>

<llo_original>
// kernel: tpu_custom_call.1
$region0: #{tpu_custom_call.1}
  #allocation0 [shape = 'u32[]', space=smem, size = 0x4, offset = 0x4, fixed_abs, tag = 'smem constant byte address 0x4 - core index']
  #allocation1 [shape = 'u32[144,128]{1,0:T(1,128)}', space=vmem, size = 0x12000, scoped, tag = 'internal scratch']
  %s0 = inlined_call_operand.hbm [shape: bf16[16,32], index: 0, kind: input, shape index: {}]
  %s1 = inlined_call_operand.hbm [shape: bf16[32,32], index: 1, kind: input, shape index: {}]
  %s2 = inlined_call_operand.vmem [shape: f32[1,32], index: 2, kind: input, shape index: {}]
  %s3 = inlined_call_operand.hbm [shape: bf16[16,32], index: 3, kind: output, shape index: {}]
  %s4 = sld [smem:[#allocation0]]
  $region30: #{tpu_custom_call.1} parent=0
    _
  %s6 = ssub.s32 1, %s4
  %s7 = scalar_select 0, %s6, %s4
  $region1: #{tpu_custom_call.1} parent=0
    #allocation2 [shape = 'u8[4096]{0}', space=vmem, size = 0x1000, scoped, tag = 'input window, operand 0, single buffered']
    #allocation3 [shape = 's32[1]{0}', space=sflag, size = 0x4, scoped, tag = 'scoped memory for tpu_custom_call.1']
    #allocation4 [shape = 's32[1]{0}', space=sflag, size = 0x4, scoped, tag = 'scoped memory for tpu_custom_call.1']
    #allocation5 [shape = 'u8[8192]{0}', space=vmem, size = 0x2000, scoped, tag = 'input window, operand 1, single buffered']
    #allocation6 [shape = 's32[1]{0}', space=sflag, size = 0x4, scoped, tag = 'scoped memory for tpu_custom_call.1']
    #allocation7 [shape = 'u8[4096]{0}', space=vmem, size = 0x1000, scoped, tag = 'output window, operand 0, single buffered']
    %8 = vsyncpa [#allocation3], 0
    %9 = vsyncpa [#allocation6], 0
    %10 = vsyncpa [#allocation4], 0
    // Predicated region
    $region2: #{tpu_custom_call.1} parent=1 // pred_check
      _
    $region3: #{tpu_custom_call.1} parent=1 // pred_check_branch
      %12 = sbr.rel (0) target = $region5
    $region4: #{tpu_custom_call.1} parent=1 // pred_region
      %s14 = ssub.s32 128, 128
      %15 = vsyncadd [#allocation3], %s14
      %s16 = sshll.u32 [#allocation2], 4
      %s17 = int_to_ptr.vmem [resolvable:$true] %s16
      %22 = dma.hbm_to_vmem [thread:$0]  %s0, 128, %s17, [#allocation3], 64, 64, 4
    $region5: #{tpu_custom_call.1} parent=1 // pred_fallthru
      _
    // Predicated region
    $region6: #{tpu_custom_call.1} parent=1 // pred_check
      _
    $region7: #{tpu_custom_call.1} parent=1 // pred_check_branch
      %24 = sbr.rel (0) target = $region9
    $region8: #{tpu_custom_call.1} parent=1 // pred_region
      %s26 = ssub.s32 256, 256
      %27 = vsyncadd [#allocation6], %s26
      %s28 = sshll.u32 [#allocation5], 4
      %s29 = int_to_ptr.vmem [resolvable:$true] %s28
      %34 = dma.hbm_to_vmem [thread:$0]  %s1, 256, %s29, [#allocation6], 64, 64, 4
    $region9: #{tpu_custom_call.1} parent=1 // pred_fallthru
      _
    // Predicated region
    $region10: #{tpu_custom_call.1} parent=1 // pred_check
      _
    $region11: #{tpu_custom_call.1} parent=1 // pred_check_branch
      %36 = sbr.rel (0) target = $region13
    $region12: #{tpu_custom_call.1} parent=1 // pred_region
      _
    $region13: #{tpu_custom_call.1} parent=1 // pred_fallthru
      _
    // Predicated region
    $region14: #{tpu_custom_call.1} parent=1 // pred_check
      _
    $region15: #{tpu_custom_call.1} parent=1 // pred_check_branch
      %38 = sbr.rel (0) target = $region17
    $region16: #{tpu_custom_call.1} parent=1 // pred_region
      %39 = dma.done [#allocation3], 128
    $region17: #{tpu_custom_call.1} parent=1 // pred_fallthru
      _
    // Predicated region
    $region18: #{tpu_custom_call.1} parent=1 // pred_check
      _
    $region19: #{tpu_custom_call.1} parent=1 // pred_check_branch
      %41 = sbr.rel (0) target = $region21
    $region20: #{tpu_custom_call.1} parent=1 // pred_region
      %42 = dma.done [#allocation6], 256
    $region21: #{tpu_custom_call.1} parent=1 // pred_fallthru
      _
    %v44 = vld [vmem:[#allocation2] sm:$0xf]
    %v45 = vld [vmem:[#allocation2 + $0x4] sm:$0xf]
    %v46 = vld [vmem:[#allocation5] sm:$0xf]
    %v47 = vld [vmem:[#allocation5 + $0x4] sm:$0xf]
    %v48 = vld [vmem:[#allocation5 + $0x8] sm:$0xf]
    %v49 = vld [vmem:[#allocation5 + $0xc] sm:$0xf]
    %v50 = vld [vmem:[%s2] sm:$0x1]
    %v52 = vlaneseq
    %v53 = vshrl.u32 %v52, 7
    %v54 = vsub.s32 0, %v53
    %v55 = vrot.slane %v50, %v54
    %v59 = vunpack.c.l.b16 %v44
    %v60 = vunpack.c.l.b16 %v45
    %v61 = vpack.c.b16 %v60, %v59
    %v66 = vunpack.c.l.b16 %v46
    %v67 = vunpack.c.l.b16 %v47
    %v68 = vunpack.c.l.b16 %v48
    %v69 = vunpack.c.l.b16 %v49
    %v70 = vpack.c.b16 %v67, %v66
    %v71 = vpack.c.b16 %v69, %v68
    %vm74 = vcmask 261120
    %v76 = vsel %vm74, %v61, 0
    %78 = vmatprep.subr.bf16.mxu0 0
    %79 = vmatpush1.bf16.msra.mxu0 %v70
    %80 = vmatprep.subr.bf16.mxu0 0
    %81 = vmatpush1.bf16.msra.mxu0 %v71
    %82 = vmatprep.subr.bf16.mxu0 0
    %83 = vmatpush1.bf16.msra.mxu0 0
    %84 = vmatprep.subr.bf16.mxu0 0
    %85 = vmatpush1.bf16.msra.mxu0 0
    %86 = vmatprep.subr.bf16.mxu0 0
    %87 = vmatpush1.bf16.msra.mxu0 0
    %88 = vmatprep.subr.bf16.mxu0 0
    %89 = vmatpush1.bf16.msra.mxu0 0
    %90 = vmatprep.subr.bf16.mxu0 0
    %91 = vmatpush1.bf16.msra.mxu0 0
    %92 = vmatprep.subr.bf16.mxu0 0
    %93 = vmatpush1.bf16.msra.mxu0 0
    %94 = vmatprep.subr.bf16.mxu0 0
    %95 = vmatpush1.bf16.msra.mxu0 0
    %96 = vmatprep.subr.bf16.mxu0 0
    %97 = vmatpush1.bf16.msra.mxu0 0
    %98 = vmatprep.subr.bf16.mxu0 0
    %99 = vmatpush1.bf16.msra.mxu0 0
    %100 = vmatprep.subr.bf16.mxu0 0
    %101 = vmatpush1.bf16.msra.mxu0 0
    %102 = vmatprep.subr.bf16.mxu0 0
    %103 = vmatpush1.bf16.msra.mxu0 0
    %104 = vmatprep.subr.bf16.mxu0 0
    %105 = vmatpush1.bf16.msra.mxu0 0
    %106 = vmatprep.subr.bf16.mxu0 0
    %107 = vmatpush1.bf16.msra.mxu0 0
    %108 = vmatprep.subr.bf16.mxu0 0
    %109 = vmatpush1.bf16.msra.mxu0 0
    %110 = vmatprep.mubr.bf16.mxu0 0
    %111 = vmatmul.mubr.bf16.gmra.mrb[0].mxu0 %v76
    %v112 = vpop.f32.mrb[0].mxu0
    %v113 = vadd.f32 %v55, %v112
    %v114 = vpop.f32.mrb[0].mxu0
    %v115 = vpop.f32.mrb[0].mxu0
    %v116 = vadd.f32 %v55, %v115
    %v117 = vpop.f32.mrb[0].mxu0
    %118 = vdwg.mxu0
    %v119 = vpack.c.bf16 %v116, %v113
    %v121 = vunpack.c.l.b16 %v119
    %v122 = vunpack.c.h.b16 %v119
    %v123 = vpack.c.b16 %v121, %v121
    %v124 = vpack.c.b16 %v122, %v122
    %vm127 = vcmask 257024
    %128 = vst.msk [vmem:[#allocation7] sm:$0xf] %vm127, %v123
    %129 = vst.msk [vmem:[#allocation7 + $0x4] sm:$0xf] %vm127, %v124
    // Predicated region
    $region22: #{tpu_custom_call.1} parent=1 // pred_check
      _
    $region23: #{tpu_custom_call.1} parent=1 // pred_check_branch
      %131 = sbr.rel (0) target = $region25
    $region24: #{tpu_custom_call.1} parent=1 // pred_region
      %s133 = ssub.s32 128, 128
      %134 = vsyncadd [#allocation4], %s133
      %s135 = sshll.u32 [#allocation7], 4
      %s136 = int_to_ptr.vmem [resolvable:$true] %s135
      %141 = dma.vmem_to_hbm [thread:$0]  %s136, 128, %s3, [#allocation4], 64, 64, 4
    $region25: #{tpu_custom_call.1} parent=1 // pred_fallthru
      _
    // Predicated region
    $region26: #{tpu_custom_call.1} parent=1 // pred_check
      _
    $region27: #{tpu_custom_call.1} parent=1 // pred_check_branch
      %143 = sbr.rel (0) target = $region29
    $region28: #{tpu_custom_call.1} parent=1 // pred_region
      %144 = dma.done [#allocation4], 128
    $region29: #{tpu_custom_call.1} parent=1 // pred_fallthru
      _
    %145 = vsyncpa [#allocation3], 1
    %146 = vsyncpa [#allocation6], 1
    %147 = vsyncpa [#allocation4], 1

</llo_original>
